<compile_context>
chip_gen: v7x
topology: tpu7x:2x2x1
jax: 0.10.0
libtpu: 0.0.40
codegen_flags: <defaults>
</compile_context>

<pallas_src>
import math
import jax
import jax.numpy as jnp
from jax.experimental import pallas as pl
from jax.experimental.pallas import tpu as pltpu


# ------------------------------ Pallas kernel --------------------------------

def _make_cls_head_kernel(Cin, F_, seg_len, offs):
    o0, o1, o2 = offs

    def kernel(x_ref, m_ref, w_ref, b_ref, cls_ref, o_ref):
        x = x_ref[...]                  # (R, Cin) channels-last, rows = seg*time
        m = m_ref[...]                  # (R, 1)   validity mask
        R = x.shape[0]

        # Boundary masks generated in-kernel (blocks always hold whole segments,
        # so row-in-block mod seg_len == row-in-segment).
        row = jax.lax.broadcasted_iota(jnp.int32, (R, 1), 0)
        rs = row % seg_len
        nf = (rs != 0).astype(jnp.float32)            # 0 at first row of a segment
        nl = (rs != seg_len - 1).astype(jnp.float32)  # 0 at last  row of a segment

        # Packed constants: static, sublane-aligned carves of the slabs.
        w0 = w_ref[o0:o0 + 3 * Cin, :]
        w1 = w_ref[o1:o1 + 3 * F_, :]
        wv = w_ref[o2:o2 + 3 * F_, :]
        b_all = b_ref[...]                            # (3, F)

        def masked_conv(h, w, b):
            # h[t-1], h[t+1] via sublane rolls; zero across segment boundaries
            # (reproduces the conv's zero padding at each level edge).
            h_prev = pltpu.roll(h, 1, 0) * nf
            h_next = pltpu.roll(h, R - 1, 0) * nl
            hk = jnp.concatenate([h_prev, h, h_next], axis=-1)   # (R, 3*C)
            out = jnp.dot(hk, w, preferred_element_type=jnp.float32)
            return (out + b) * m                                 # MaskedConv1D

        # head: 2 x (MaskedConv1D -> Identity norm -> ReLU), then vis_proj conv
        h = jax.nn.relu(masked_conv(x, w0, b_all[0:1]))
        h = jax.nn.relu(masked_conv(h, w1, b_all[1:2]))
        h = masked_conv(h, wv, b_all[2:3])

        # F.normalize over channels: rsqrt-multiply (EUP) instead of sqrt+div.
        ss = jnp.sum(h * h, axis=-1, keepdims=True)
        h = h * jax.lax.rsqrt(jnp.maximum(ss, 1e-24))

        # logit_scale already folded into cls_ref; masked rows are exactly 0,
        # so no trailing mask multiply is needed before the lane-dense store.
        o_ref[...] = jnp.dot(h, cls_ref[...],
                             preferred_element_type=jnp.float32
                             ).astype(o_ref.dtype)

    return kernel


# ------------------------------ Wrappers --------------------------------------

def _round_up(x, n):
    return ((x + n - 1) // n) * n


def _cls_head_call(x, m, w_slab, b_slab, cls_mat, *, Cin, F_, seg_len, offs):
    M_total = x.shape[0]
    Npad = cls_mat.shape[1]
    segs = M_total // seg_len

    # Large blocks amortize the ~0.35 us/step overhead; but keep >= 2 grid
    # steps when possible so the "parallel" axis can shard across v7x's 2 TCs.
    target_rows = 2048
    spb = max(1, min(segs, max(1, target_rows // seg_len)))
    if segs >= 2:
        spb = min(spb, max(1, segs // 2))
    while segs % spb:
        spb -= 1
    block_rows = spb * seg_len                  # multiple of 8 (seg_len is)
    grid = (segs // spb,)

    kernel = _make_cls_head_kernel(Cin, F_, seg_len, offs)

    return pl.pallas_call(
        kernel,
        out_shape=jax.ShapeDtypeStruct((M_total, Npad), jnp.float32),
        grid=grid,
        in_specs=[
            pl.BlockSpec((block_rows, Cin), lambda g: (g, 0)),   # x
            pl.BlockSpec((block_rows, 1), lambda g: (g, 0)),     # mask
            pl.BlockSpec(w_slab.shape, lambda g: (0, 0)),        # packed conv W
            pl.BlockSpec(b_slab.shape, lambda g: (0, 0)),        # packed conv b
            pl.BlockSpec(cls_mat.shape, lambda g: (0, 0)),       # classifier
        ],
        out_specs=pl.BlockSpec((block_rows, Npad), lambda g: (g, 0)),
        compiler_params=pltpu.CompilerParams(
            dimension_semantics=("parallel",),
            vmem_limit_bytes=32 * 1024 * 1024),
    )(x, m, w_slab, b_slab, cls_mat)


def pt_transformer_cls_head_forward(params, fpn_feats, fpn_masks,
                                    clip_class_feature, task_id,
                                    return_packed=False):
    """fpn_feats: list of (B, C, T); fpn_masks: list of (B, 1, T) bool;
    clip_class_feature: (num_tasks, num_classes, clip_dim)."""
    assert len(fpn_feats) == len(fpn_masks)
    L = len(fpn_feats)
    B, Cin, _ = fpn_feats[0].shape
    F_ = params["w1"].shape[2]
    Ts = [int(f.shape[2]) for f in fpn_feats]
    seg_len = _round_up(max(Ts), 8)

    # clip_proj + F.normalize in plain JAX (tiny, one-shot). logit_scale is
    # folded directly into the zero-padded, lane-dense classifier matrix.
    cls_feat = clip_class_feature[task_id].astype(jnp.float32)
    y = cls_feat @ params["clip_w"] + params["clip_b"][0]          # (N, F)
    y = y * jax.lax.rsqrt(jnp.maximum(jnp.sum(y * y, axis=-1, keepdims=True),
                                      1e-24))
    N = y.shape[0]
    Npad = _round_up(N, 128)
    scale = jnp.exp(params["logit_scale"]).astype(jnp.float32)
    cls_mat = jnp.zeros((F_, Npad), jnp.float32).at[:, :N].set(scale * y.T)

    # Stack all levels & the batch into one channels-last slab (rows, C):
    # transpose + zero-pad T + concat fuse into one wrapper materialization.
    def stack(xs):
        return jnp.concatenate(
            [jnp.pad(jnp.transpose(a, (0, 2, 1)).astype(jnp.float32),
                     ((0, 0), (0, seg_len - a.shape[2]), (0, 0)))
             for a in xs], axis=0)

    feats = stack(fpn_feats).reshape(L * B * seg_len, Cin)
    masks = stack(fpn_masks).reshape(L * B * seg_len, 1)

    # Pack the three (3, C, F) conv weights into ONE row-stacked, 8-row-aligned
    # slab and the biases into one (3, F) slab (operand/DMA-descriptor count).
    def pad_rows(w, r):
        return jnp.pad(w, ((0, r - w.shape[0]), (0, 0)))

    w0 = params["w0"].reshape(-1, F_)       # (3*Cin, F)
    w1 = params["w1"].reshape(-1, F_)       # (3*F,   F)
    wv = params["wv"].reshape(-1, F_)       # (3*F,   F)
    r0, r1 = _round_up(3 * Cin, 8), _round_up(3 * F_, 8)
    offs = (0, r0, r0 + r1)
    w_slab = jnp.concatenate([pad_rows(w0, r0), pad_rows(w1, r1),
                              pad_rows(wv, r1)], axis=0)
    b_slab = jnp.concatenate([params["b0"], params["b1"], params["bv"]],
                             axis=0)        # (3, F)

    logits = _cls_head_call(feats, masks, w_slab, b_slab, cls_mat,
                            Cin=Cin, F_=F_, seg_len=seg_len, offs=offs)
    logits = logits.reshape(L, B, seg_len, Npad)

    if return_packed:
        # Consumers that can work on the packed slab avoid L extra HBM slice
        # passes over the padded output.
        return logits, Ts, N

    return tuple(logits[l, :, :Ts[l], :N] for l in range(L))


# ------------------------ Parameters (deterministic) --------------------------

def init_params(key, input_dim, feat_dim, num_classes, clip_dim):
    keys = jax.random.split(key, 8)

    def u(k, shape, fan_in):
        bound = 1.0 / math.sqrt(fan_in)
        return jax.random.uniform(k, shape, jnp.float32, -bound, bound)

    return {
        # head[0]: MaskedConv1D(input_dim, feat_dim, k=3, bias=True)
        "w0": u(keys[0], (3, input_dim, feat_dim), 3 * input_dim),
        "b0": u(keys[1], (1, feat_dim), 3 * input_dim),
        # head[1]: MaskedConv1D(feat_dim, feat_dim, k=3, bias=True)
        "w1": u(keys[2], (3, feat_dim, feat_dim), 3 * feat_dim),
        "b1": u(keys[3], (1, feat_dim), 3 * feat_dim),
        # vis_proj: MaskedConv1D(feat_dim, feat_dim, k=3, bias=True)
        "wv": u(keys[4], (3, feat_dim, feat_dim), 3 * feat_dim),
        "bv": u(keys[5], (1, feat_dim), 3 * feat_dim),
        # clip_proj: Linear(clip_dim, feat_dim)
        "clip_w": u(keys[6], (clip_dim, feat_dim), clip_dim),
        "clip_b": u(keys[7], (1, feat_dim), clip_dim),
        "logit_scale": jnp.asarray(math.log(1.0 / 0.07), jnp.float32),
    }


# --------------------------- Pure-JAX reference --------------------------------

def reference_forward(params, fpn_feats, fpn_masks, clip_class_feature, task_id):
    cls_feat = clip_class_feature[task_id].astype(jnp.float32)
    y = cls_feat @ params["clip_w"] + params["clip_b"][0]
    y = y / jnp.maximum(jnp.linalg.norm(y, axis=1, keepdims=True), 1e-12)
    scale = jnp.exp(params["logit_scale"])

    def conv(x, m, w, b):
        xp = jnp.pad(x, ((0, 0), (1, 1), (0, 0)))
        out = xp[:, :-2] @ w[0] + xp[:, 1:-1] @ w[1] + xp[:, 2:] @ w[2] + b[0]
        return out * m

    outs = tuple()
    for feat, mask in zip(fpn_feats, fpn_masks):
        x = jnp.transpose(feat, (0, 2, 1))
        m = jnp.transpose(mask, (0, 2, 1)).astype(jnp.float32)
        h = jax.nn.relu(conv(x, m, params["w0"], params["b0"]))
        h = jax.nn.relu(conv(h, m, params["w1"], params["b1"]))
        h = conv(h, m, params["wv"], params["bv"])
        h = h / jnp.maximum(jnp.linalg.norm(h, axis=-1, keepdims=True), 1e-12)
        outs += (scale * (h @ y.T) * m,)
    return outs


# ----------------------------------- Main --------------------------------------

if __name__ == "__main__":
    B, input_dim, feat_dim, num_classes, clip_dim = 2, 32, 32, 8, 64
    num_tasks, level_T, valid_len = 2, [16, 8], [16, 5]

    key = jax.random.PRNGKey(0)
    kp, kf, kc = jax.random.split(key, 3)
    params = init_params(kp, input_dim, feat_dim, num_classes, clip_dim)

    fpn_feats = [jax.random.normal(k, (B, input_dim, T), jnp.float32)
                 for k, T in zip(jax.random.split(kf, len(level_T)), level_T)]
    fpn_masks = []
    for T, Lv in zip(level_T, valid_len):
        t = jnp.arange(T)
        fpn_masks.append(jnp.stack([t < T, t < Lv], axis=0)[:, None, :])  # (B,1,T)

    clip_class_feature = jax.random.normal(
        kc, (num_tasks, num_classes, clip_dim), jnp.float32)
    task_id = 1

    outs = pt_transformer_cls_head_forward(
        params, fpn_feats, fpn_masks, clip_class_feature, task_id)
    outs = jax.block_until_ready(outs)

    refs = reference_forward(
        params, fpn_feats, fpn_masks, clip_class_feature, task_id)
    for o, r in zip(outs, refs):
        assert o.shape == r.shape, (o.shape, r.shape)
        err = float(jnp.max(jnp.abs(o - r)))
        if not jnp.allclose(o, r, atol=1e-4, rtol=1e-4):
            raise AssertionError(f"mismatch vs reference, max abs err = {err}")

    print("KERNEL_OK")
</pallas_src>

<mosaic_0001>
module attributes {stable_mosaic.version = 11 : i64} {
  func.func @kernel(%arg0: i32, %arg1: memref<32x32xf32, #tpu.memory_space<vmem>>, %arg2: memref<32x1xf32, #tpu.memory_space<vmem>>, %arg3: memref<288x32xf32, #tpu.memory_space<vmem>>, %arg4: memref<3x32xf32, #tpu.memory_space<vmem>>, %arg5: memref<32x128xf32, #tpu.memory_space<vmem>>, %arg6: memref<32x128xf32, #tpu.memory_space<vmem>>) attributes {dimension_semantics = [#tpu.dimension_semantics<parallel>], iteration_bounds = array<i64: 2>, scalar_prefetch = 0 : i64, scratch_operands = 0 : i64, tpu.core_type = #tpu.core_type<tc>, window_params = [{transform_indices = @transform_0, window_bounds = array<i64: 32, 32>}, {transform_indices = @transform_1, window_bounds = array<i64: 32, 1>}, {pipeline_mode = #tpu.pipeline_mode<synchronous>, transform_indices = @transform_2, window_bounds = array<i64: 288, 32>}, {pipeline_mode = #tpu.pipeline_mode<synchronous>, transform_indices = @transform_3, window_bounds = array<i64: 3, 32>}, {pipeline_mode = #tpu.pipeline_mode<synchronous>, transform_indices = @transform_4, window_bounds = array<i64: 32, 128>}, {transform_indices = @transform_5, window_bounds = array<i64: 32, 128>}]} {
    %c0 = arith.constant 0 : index
    %c0_0 = arith.constant 0 : index
    %0 = vector.load %arg1[%c0, %c0_0] : memref<32x32xf32, #tpu.memory_space<vmem>>, vector<32x32xf32>
    %c0_1 = arith.constant 0 : index
    %c0_2 = arith.constant 0 : index
    %1 = vector.load %arg2[%c0_1, %c0_2] : memref<32x1xf32, #tpu.memory_space<vmem>>, vector<32x1xf32>
    %2 = tpu.iota {dimensions = array<i32: 0>} : vector<32x1xi32>
    %c16_i32 = arith.constant 16 : i32
    %c0_i32 = arith.constant 0 : i32
    %3 = arith.cmpi eq, %c16_i32, %c0_i32 : i32
    %c1_i32 = arith.constant 1 : i32
    %4 = arith.select %3, %c1_i32, %c16_i32 : i32
    %5 = vector.broadcast %4 : i32 to vector<32x1xi32>
    %6 = arith.remsi %2, %5 : vector<32x1xi32>
    %c0_i32_3 = arith.constant 0 : i32
    %7 = vector.broadcast %c0_i32_3 : i32 to vector<32x1xi32>
    %8 = arith.cmpi ne, %6, %7 : vector<32x1xi32>
    %c0_i32_4 = arith.constant 0 : i32
    %9 = vector.broadcast %c0_i32_4 : i32 to vector<32x1xi32>
    %10 = arith.cmpi slt, %6, %9 : vector<32x1xi32>
    %c0_i32_5 = arith.constant 0 : i32
    %11 = arith.cmpi slt, %4, %c0_i32_5 : i32
    %12 = vector.broadcast %11 : i1 to vector<32x1xi1>
    %13 = vector.broadcast %12 : vector<32x1xi1> to vector<32x1xi1>
    %14 = arith.xori %10, %13 : vector<32x1xi1>
    %15 = arith.andi %14, %8 : vector<32x1xi1>
    %16 = vector.broadcast %4 : i32 to vector<32x1xi32>
    %17 = arith.addi %6, %16 : vector<32x1xi32>
    %18 = arith.select %15, %17, %6 : vector<32x1xi1>, vector<32x1xi32>
    %c0_i32_6 = arith.constant 0 : i32
    %19 = vector.broadcast %c0_i32_6 : i32 to vector<32x1xi32>
    %20 = arith.cmpi ne, %18, %19 : vector<32x1xi32>
    %21 = arith.extui %20 : vector<32x1xi1> to vector<32x1xi32>
    %22 = arith.sitofp %21 : vector<32x1xi32> to vector<32x1xf32>
    %c15_i32 = arith.constant 15 : i32
    %23 = vector.broadcast %c15_i32 : i32 to vector<32x1xi32>
    %24 = arith.cmpi ne, %18, %23 : vector<32x1xi32>
    %25 = arith.extui %24 : vector<32x1xi1> to vector<32x1xi32>
    %26 = arith.sitofp %25 : vector<32x1xi32> to vector<32x1xf32>
    %c0_7 = arith.constant 0 : index
    %c0_8 = arith.constant 0 : index
    %27 = vector.load %arg3[%c0_7, %c0_8] : memref<288x32xf32, #tpu.memory_space<vmem>>, vector<96x32xf32>
    %c96 = arith.constant 96 : index
    %c0_9 = arith.constant 0 : index
    %28 = vector.load %arg3[%c96, %c0_9] : memref<288x32xf32, #tpu.memory_space<vmem>>, vector<96x32xf32>
    %c192 = arith.constant 192 : index
    %c0_10 = arith.constant 0 : index
    %29 = vector.load %arg3[%c192, %c0_10] : memref<288x32xf32, #tpu.memory_space<vmem>>, vector<96x32xf32>
    %c0_11 = arith.constant 0 : index
    %c0_12 = arith.constant 0 : index
    %30 = vector.load %arg4[%c0_11, %c0_12] : memref<3x32xf32, #tpu.memory_space<vmem>>, vector<3x32xf32>
    %31 = vector.extract_strided_slice %30 {offsets = [0, 0], sizes = [1, 32], strides = [1, 1]} : vector<3x32xf32> to vector<1x32xf32>
    %c1_i32_13 = arith.constant 1 : i32
    %32 = tpu.dynamic_rotate %0 by %c1_i32_13 dim 0 : vector<32x32xf32>, i32 -> vector<32x32xf32>
    %33 = vector.broadcast %22 : vector<32x1xf32> to vector<32x32xf32>
    %34 = arith.mulf %32, %33 : vector<32x32xf32>
    %c31_i32 = arith.constant 31 : i32
    %35 = tpu.dynamic_rotate %0 by %c31_i32 dim 0 : vector<32x32xf32>, i32 -> vector<32x32xf32>
    %36 = vector.broadcast %26 : vector<32x1xf32> to vector<32x32xf32>
    %37 = arith.mulf %35, %36 : vector<32x32xf32>
    %38 = tpu.concatenate %34, %0, %37 in 1 : vector<32x32xf32>, vector<32x32xf32>, vector<32x32xf32> -> vector<32x96xf32>
    %cst = arith.constant dense<0.000000e+00> : vector<32x32xf32>
    %39 = tpu.matmul %38, %27, %cst {dimension_numbers = #tpu.dot_dimension_numbers<[1], [0], [0], [1], [0, 0, 1, 1], [], []>} : vector<32x96xf32>, vector<96x32xf32>, vector<32x32xf32> -> vector<32x32xf32>
    %40 = vector.broadcast %31 : vector<1x32xf32> to vector<32x32xf32>
    %41 = arith.addf %39, %40 : vector<32x32xf32>
    %42 = vector.broadcast %1 : vector<32x1xf32> to vector<32x32xf32>
    %43 = arith.mulf %41, %42 : vector<32x32xf32>
    %cst_14 = arith.constant 0.000000e+00 : f32
    %44 = vector.broadcast %cst_14 : f32 to vector<32x32xf32>
    %45 = arith.maximumf %43, %44 : vector<32x32xf32>
    %46 = vector.extract_strided_slice %30 {offsets = [1, 0], sizes = [1, 32], strides = [1, 1]} : vector<3x32xf32> to vector<1x32xf32>
    %c1_i32_15 = arith.constant 1 : i32
    %47 = tpu.dynamic_rotate %45 by %c1_i32_15 dim 0 : vector<32x32xf32>, i32 -> vector<32x32xf32>
    %48 = vector.broadcast %22 : vector<32x1xf32> to vector<32x32xf32>
    %49 = arith.mulf %47, %48 : vector<32x32xf32>
    %c31_i32_16 = arith.constant 31 : i32
    %50 = tpu.dynamic_rotate %45 by %c31_i32_16 dim 0 : vector<32x32xf32>, i32 -> vector<32x32xf32>
    %51 = vector.broadcast %26 : vector<32x1xf32> to vector<32x32xf32>
    %52 = arith.mulf %50, %51 : vector<32x32xf32>
    %53 = tpu.concatenate %49, %45, %52 in 1 : vector<32x32xf32>, vector<32x32xf32>, vector<32x32xf32> -> vector<32x96xf32>
    %cst_17 = arith.constant dense<0.000000e+00> : vector<32x32xf32>
    %54 = tpu.matmul %53, %28, %cst_17 {dimension_numbers = #tpu.dot_dimension_numbers<[1], [0], [0], [1], [0, 0, 1, 1], [], []>} : vector<32x96xf32>, vector<96x32xf32>, vector<32x32xf32> -> vector<32x32xf32>
    %55 = vector.broadcast %46 : vector<1x32xf32> to vector<32x32xf32>
    %56 = arith.addf %54, %55 : vector<32x32xf32>
    %57 = vector.broadcast %1 : vector<32x1xf32> to vector<32x32xf32>
    %58 = arith.mulf %56, %57 : vector<32x32xf32>
    %cst_18 = arith.constant 0.000000e+00 : f32
    %59 = vector.broadcast %cst_18 : f32 to vector<32x32xf32>
    %60 = arith.maximumf %58, %59 : vector<32x32xf32>
    %61 = vector.extract_strided_slice %30 {offsets = [2, 0], sizes = [1, 32], strides = [1, 1]} : vector<3x32xf32> to vector<1x32xf32>
    %c1_i32_19 = arith.constant 1 : i32
    %62 = tpu.dynamic_rotate %60 by %c1_i32_19 dim 0 : vector<32x32xf32>, i32 -> vector<32x32xf32>
    %63 = vector.broadcast %22 : vector<32x1xf32> to vector<32x32xf32>
    %64 = arith.mulf %62, %63 : vector<32x32xf32>
    %c31_i32_20 = arith.constant 31 : i32
    %65 = tpu.dynamic_rotate %60 by %c31_i32_20 dim 0 : vector<32x32xf32>, i32 -> vector<32x32xf32>
    %66 = vector.broadcast %26 : vector<32x1xf32> to vector<32x32xf32>
    %67 = arith.mulf %65, %66 : vector<32x32xf32>
    %68 = tpu.concatenate %64, %60, %67 in 1 : vector<32x32xf32>, vector<32x32xf32>, vector<32x32xf32> -> vector<32x96xf32>
    %cst_21 = arith.constant dense<0.000000e+00> : vector<32x32xf32>
    %69 = tpu.matmul %68, %29, %cst_21 {dimension_numbers = #tpu.dot_dimension_numbers<[1], [0], [0], [1], [0, 0, 1, 1], [], []>} : vector<32x96xf32>, vector<96x32xf32>, vector<32x32xf32> -> vector<32x32xf32>
    %70 = vector.broadcast %61 : vector<1x32xf32> to vector<32x32xf32>
    %71 = arith.addf %69, %70 : vector<32x32xf32>
    %72 = vector.broadcast %1 : vector<32x1xf32> to vector<32x32xf32>
    %73 = arith.mulf %71, %72 : vector<32x32xf32>
    %74 = arith.mulf %73, %73 : vector<32x32xf32>
    %cst_22 = arith.constant dense<0.000000e+00> : vector<32xf32>
    %75 = vector.multi_reduction <add>, %74, %cst_22 [1] : vector<32x32xf32> to vector<32xf32>
    %76 = vector.shape_cast %75 : vector<32xf32> to vector<32x1xf32>
    %cst_23 = arith.constant 1.000000e-24 : f32
    %77 = vector.broadcast %cst_23 : f32 to vector<32x1xf32>
    %78 = arith.maximumf %76, %77 : vector<32x1xf32>
    %79 = math.rsqrt %78 : vector<32x1xf32>
    %80 = vector.broadcast %79 : vector<32x1xf32> to vector<32x32xf32>
    %81 = arith.mulf %73, %80 : vector<32x32xf32>
    %c0_24 = arith.constant 0 : index
    %c0_25 = arith.constant 0 : index
    %82 = vector.load %arg5[%c0_24, %c0_25] : memref<32x128xf32, #tpu.memory_space<vmem>>, vector<32x128xf32>
    %cst_26 = arith.constant dense<0.000000e+00> : vector<32x128xf32>
    %83 = tpu.matmul %81, %82, %cst_26 {dimension_numbers = #tpu.dot_dimension_numbers<[1], [0], [0], [1], [0, 0, 1, 1], [], []>} : vector<32x32xf32>, vector<32x128xf32>, vector<32x128xf32> -> vector<32x128xf32>
    %c0_27 = arith.constant 0 : index
    %c0_28 = arith.constant 0 : index
    %84 = vector.load %arg6[%c0_27, %c0_28] : memref<32x128xf32, #tpu.memory_space<vmem>>, vector<32x128xf32>
    tpu.vector_store %arg6[%c0_27, %c0_28], %83 {strides = array<i32>} : memref<32x128xf32, #tpu.memory_space<vmem>>, vector<32x128xf32>,
    return
  }
  func.func @transform_0(%arg0: i32) -> (i32, i32) {
    %c0_i32 = arith.constant 0 : i32
    %c0_i32_0 = arith.constant 0 : i32
    return %arg0, %c0_i32 : i32, i32
  }
  func.func @transform_1(%arg0: i32) -> (i32, i32) {
    %c0_i32 = arith.constant 0 : i32
    %c0_i32_0 = arith.constant 0 : i32
    return %arg0, %c0_i32 : i32, i32
  }
  func.func @transform_2(%arg0: i32) -> (i32, i32) {
    %c0_i32 = arith.constant 0 : i32
    %c0_i32_0 = arith.constant 0 : i32
    %c0_i32_1 = arith.constant 0 : i32
    return %c0_i32, %c0_i32_0 : i32, i32
  }
  func.func @transform_3(%arg0: i32) -> (i32, i32) {
    %c0_i32 = arith.constant 0 : i32
    %c0_i32_0 = arith.constant 0 : i32
    %c0_i32_1 = arith.constant 0 : i32
    return %c0_i32, %c0_i32_0 : i32, i32
  }
  func.func @transform_4(%arg0: i32) -> (i32, i32) {
    %c0_i32 = arith.constant 0 : i32
    %c0_i32_0 = arith.constant 0 : i32
    %c0_i32_1 = arith.constant 0 : i32
    return %c0_i32, %c0_i32_0 : i32, i32
  }
  func.func @transform_5(%arg0: i32) -> (i32, i32) {
    %c0_i32 = arith.constant 0 : i32
    %c0_i32_0 = arith.constant 0 : i32
    return %arg0, %c0_i32 : i32, i32
  }
}

</mosaic_0001>

<llo_original>
// kernel: tpu_custom_call.1
$region0: #{tpu_custom_call.1}
  #allocation0 [shape = 'u32[]', space=smem, size = 0x4, offset = 0x4, fixed_abs, tag = 'smem constant byte address 0x4 - core index']
  #allocation1 [shape = 'u32[144,128]{1,0:T(1,128)}', space=vmem, size = 0x12000, scoped, tag = 'internal scratch']
  %s0 = inlined_call_operand.vmem [shape: f32[64,32], index: 0, kind: input, shape index: {}]
  %s1 = inlined_call_operand.vmem [shape: f32[64,1], index: 1, kind: input, shape index: {}]
  %s2 = inlined_call_operand.vmem [shape: f32[288,32], index: 2, kind: input, shape index: {}]
  %s3 = inlined_call_operand.vmem [shape: f32[3,32], index: 3, kind: input, shape index: {}]
  %s4 = inlined_call_operand.vmem [shape: f32[32,128], index: 4, kind: input, shape index: {}]
  %s5 = inlined_call_operand.hbm [shape: f32[64,128], index: 5, kind: output, shape index: {}]
  %s6 = sld [smem:[#allocation0]]
  $region53: #{tpu_custom_call.1} parent=0
    _
  %s8 = ssub.s32 1, %s6
  %s9 = scalar_select 0, %s8, %s6
  $region1: #{tpu_custom_call.1} parent=0
    #allocation2 [shape = 'u8[32768]{0}', space=vmem, size = 0x8000, scoped, tag = 'output window, operand 0']
    #allocation3 [shape = 's32[2]{0}', space=sflag, size = 0x8, scoped, tag = 'scoped memory for tpu_custom_call.1']
    %10 = vsyncpa [#allocation3], 0
    %s11 = scalar_lea.sflag [#allocation3], 1
    %12 = vsyncpa %s11, 0
    loop: start=0, step=1, limit=4
    $region2: #{tpu_custom_call.1} parent=1 // loop_pre_header
      _
    $region3: #{tpu_custom_call.1} parent=1 // loop_header
      %s14 = sphi 0, %s18
      %p15 = scmp.ge.s32.totalorder %s14, 4
      %s24 = sphi 0, %s26
      %s27 = sphi 0, %s24
      %s28 = sphi 0, %s27
      %s44 = sphi 0, %s28
      %s50 = sphi 0, %s52
      %s53 = sphi 0, %s50
      %s54 = sphi 0, %s53
      %s70 = sphi 0, %s54
      %s74 = sphi 0, %s74
      %s76 = sphi 0, %s74
      %s77 = sphi 0, %s76
      %s91 = sphi 0, %s77
      %s95 = sphi 0, %s95
      %s97 = sphi 0, %s95
      %s98 = sphi 0, %s97
      %s112 = sphi 0, %s98
      %s116 = sphi 0, %s116
      %s118 = sphi 0, %s116
      %s119 = sphi 0, %s118
      %s133 = sphi 0, %s119
      %s139 = sphi 0, %s141
      %s142 = sphi 0, %s139
      %s143 = sphi 0, %s142
      %s159 = sphi 0, %s143
    $region4: #{tpu_custom_call.1} parent=1 // loop_header_branch
      %17 = sbr.rel (%p15) target = $region8
    $region5: #{tpu_custom_call.1} parent=1 // loop_body
      %s19 = ssub.s32 %s14, 1
      %s20 = ssub.s32 %s14, 2
      %s21 = sadd.s32 %s14, 1
      %s22 = ssub.s32 %s14, %s21
      %p23 = scmp.eq.s32.totalorder %s22, 0
      %s25 = sadd.s32 %s24, 1
      %s26 = scalar_select %p23, %s24, %s25
      %p29 = pneg %p23
      %p30 = scmp.eq.s32.totalorder %s14, 1
      %p31 = por %p29, %p30
      %p32 = scmp.ne.s32.totalorder %s24, %s27
      %p33 = scmp.eq.s32.totalorder %s14, 0
      %p34 = por %p32, %p33
      %p35 = scmp.ne.s32.totalorder %s24, %s27
      %p36 = scmp.eq.s32.totalorder %s19, 1
      %p37 = por %p35, %p36
      %p38 = scmp.ne.s32.totalorder %s27, %s28
      %p39 = scmp.eq.s32.totalorder %s19, 0
      %p40 = por %p38, %p39
      %p41 = scmp.ne.s32.totalorder %s27, %s28
      %p42 = scmp.eq.s32.totalorder %s20, 1
      %p43 = por %p41, %p42
      %p45 = scmp.ne.s32.totalorder %s28, %s44
      %p46 = scmp.eq.s32.totalorder %s20, 0
      %p47 = por %p45, %p46
      %s48 = ssub.s32 %s14, %s21
      %p49 = scmp.eq.s32.totalorder %s48, 0
      %s51 = sadd.s32 %s50, 1
      %s52 = scalar_select %p49, %s50, %s51
      %p55 = pneg %p49
      %p56 = scmp.eq.s32.totalorder %s14, 1
      %p57 = por %p55, %p56
      %p58 = scmp.ne.s32.totalorder %s50, %s53
      %p59 = scmp.eq.s32.totalorder %s14, 0
      %p60 = por %p58, %p59
      %p61 = scmp.ne.s32.totalorder %s50, %s53
      %p62 = scmp.eq.s32.totalorder %s19, 1
      %p63 = por %p61, %p62
      %p64 = scmp.ne.s32.totalorder %s53, %s54
      %p65 = scmp.eq.s32.totalorder %s19, 0
      %p66 = por %p64, %p65
      %p67 = scmp.ne.s32.totalorder %s53, %s54
      %p68 = scmp.eq.s32.totalorder %s20, 1
      %p69 = por %p67, %p68
      %p71 = scmp.ne.s32.totalorder %s54, %s70
      %p72 = scmp.eq.s32.totalorder %s20, 0
      %p73 = por %p71, %p72
      %s75 = sadd.s32 %s74, 1
      %p78 = scmp.eq.s32.totalorder %s14, 1
      %p79 = scmp.ne.s32.totalorder %s74, %s76
      %p80 = scmp.eq.s32.totalorder %s14, 0
      %p81 = por %p79, %p80
      %p82 = scmp.ne.s32.totalorder %s74, %s76
      %p83 = scmp.eq.s32.totalorder %s19, 1
      %p84 = por %p82, %p83
      %p85 = scmp.ne.s32.totalorder %s76, %s77
      %p86 = scmp.eq.s32.totalorder %s19, 0
      %p87 = por %p85, %p86
      %p88 = scmp.ne.s32.totalorder %s76, %s77
      %p89 = scmp.eq.s32.totalorder %s20, 1
      %p90 = por %p88, %p89
      %p92 = scmp.ne.s32.totalorder %s77, %s91
      %p93 = scmp.eq.s32.totalorder %s20, 0
      %p94 = por %p92, %p93
      %s96 = sadd.s32 %s95, 1
      %p99 = scmp.eq.s32.totalorder %s14, 1
      %p100 = scmp.ne.s32.totalorder %s95, %s97
      %p101 = scmp.eq.s32.totalorder %s14, 0
      %p102 = por %p100, %p101
      %p103 = scmp.ne.s32.totalorder %s95, %s97
      %p104 = scmp.eq.s32.totalorder %s19, 1
      %p105 = por %p103, %p104
      %p106 = scmp.ne.s32.totalorder %s97, %s98
      %p107 = scmp.eq.s32.totalorder %s19, 0
      %p108 = por %p106, %p107
      %p109 = scmp.ne.s32.totalorder %s97, %s98
      %p110 = scmp.eq.s32.totalorder %s20, 1
      %p111 = por %p109, %p110
      %p113 = scmp.ne.s32.totalorder %s98, %s112
      %p114 = scmp.eq.s32.totalorder %s20, 0
      %p115 = por %p113, %p114
      %s117 = sadd.s32 %s116, 1
      %p120 = scmp.eq.s32.totalorder %s14, 1
      %p121 = scmp.ne.s32.totalorder %s116, %s118
      %p122 = scmp.eq.s32.totalorder %s14, 0
      %p123 = por %p121, %p122
      %p124 = scmp.ne.s32.totalorder %s116, %s118
      %p125 = scmp.eq.s32.totalorder %s19, 1
      %p126 = por %p124, %p125
      %p127 = scmp.ne.s32.totalorder %s118, %s119
      %p128 = scmp.eq.s32.totalorder %s19, 0
      %p129 = por %p127, %p128
      %p130 = scmp.ne.s32.totalorder %s118, %s119
      %p131 = scmp.eq.s32.totalorder %s20, 1
      %p132 = por %p130, %p131
      %p134 = scmp.ne.s32.totalorder %s119, %s133
      %p135 = scmp.eq.s32.totalorder %s20, 0
      %p136 = por %p134, %p135
      %s137 = ssub.s32 %s14, %s21
      %p138 = scmp.eq.s32.totalorder %s137, 0
      %s140 = sadd.s32 %s139, 1
      %s141 = scalar_select %p138, %s139, %s140
      %p144 = pneg %p138
      %p145 = scmp.eq.s32.totalorder %s14, 1
      %p146 = por %p144, %p145
      %p147 = scmp.ne.s32.totalorder %s139, %s142
      %p148 = scmp.eq.s32.totalorder %s14, 0
      %p149 = por %p147, %p148
      %p150 = scmp.ne.s32.totalorder %s139, %s142
      %p151 = scmp.eq.s32.totalorder %s19, 1
      %p152 = por %p150, %p151
      %p153 = scmp.ne.s32.totalorder %s142, %s143
      %p154 = scmp.eq.s32.totalorder %s19, 0
      %p155 = por %p153, %p154
      %p156 = scmp.ne.s32.totalorder %s142, %s143
      %p157 = scmp.eq.s32.totalorder %s20, 1
      %p158 = por %p156, %p157
      %p160 = scmp.ne.s32.totalorder %s143, %s159
      %p161 = scmp.eq.s32.totalorder %s20, 0
      %p162 = por %p160, %p161
      %p163 = scmp.le.s32.totalorder 1, %s14
      %p164 = scmp.lt.s32.totalorder %s14, 3
      %p165 = pnand %p163, %p164
      %p166 = pneg %p165
      // Predicated region
      $region9: #{tpu_custom_call.1} parent=5 // pred_check
        _
      $region10: #{tpu_custom_call.1} parent=5 // pred_check_branch
        %168 = sbr.rel (%p165) target = $region12
      $region11: #{tpu_custom_call.1} parent=5 // pred_region
        %s169 = ssub.s32 %s14, 1
        // Predicated region
        $region13: #{tpu_custom_call.1} parent=11 // pred_check
          %p170 = pneg %p87
        $region14: #{tpu_custom_call.1} parent=11 // pred_check_branch
          %172 = sbr.rel (%p170) target = $region16
        $region15: #{tpu_custom_call.1} parent=11 // pred_region
          _
        $region16: #{tpu_custom_call.1} parent=11 // pred_fallthru
          _
        // Predicated region
        $region17: #{tpu_custom_call.1} parent=11 // pred_check
          %p173 = pneg %p108
        $region18: #{tpu_custom_call.1} parent=11 // pred_check_branch
          %175 = sbr.rel (%p173) target = $region20
        $region19: #{tpu_custom_call.1} parent=11 // pred_region
          _
        $region20: #{tpu_custom_call.1} parent=11 // pred_fallthru
          _
        // Predicated region
        $region21: #{tpu_custom_call.1} parent=11 // pred_check
          %p176 = pneg %p129
        $region22: #{tpu_custom_call.1} parent=11 // pred_check_branch
          %178 = sbr.rel (%p176) target = $region24
        $region23: #{tpu_custom_call.1} parent=11 // pred_region
          _
        $region24: #{tpu_custom_call.1} parent=11 // pred_fallthru
          _
      $region12: #{tpu_custom_call.1} parent=5 // pred_fallthru
        _
      %p179 = scmp.lt.s32.totalorder %s14, 2
      // Predicated region
      $region25: #{tpu_custom_call.1} parent=5 // pred_check
        %p180 = pneg %p179
      $region26: #{tpu_custom_call.1} parent=5 // pred_check_branch
        %182 = sbr.rel (%p180) target = $region28
      $region27: #{tpu_custom_call.1} parent=5 // pred_region
        // Predicated region
        $region29: #{tpu_custom_call.1} parent=27 // pred_check
          %p183 = pneg %p34
        $region30: #{tpu_custom_call.1} parent=27 // pred_check_branch
          %185 = sbr.rel (%p183) target = $region32
        $region31: #{tpu_custom_call.1} parent=27 // pred_region
          %s186 = smul.u32 4, %s14
          %p187 = scmp.lt.s32.totalorder %s186, 7
          %s188 = scalar_select %p187, %s186, 7
          %s189 = smul.addr %s188, 8
          %s190 = scalar_lea.vmem %s0, %s189
          %s191 = smul.u32 4, %s14
        $region32: #{tpu_custom_call.1} parent=27 // pred_fallthru
          _
        // Predicated region
        $region33: #{tpu_custom_call.1} parent=27 // pred_check
          %p192 = pneg %p60
        $region34: #{tpu_custom_call.1} parent=27 // pred_check_branch
          %194 = sbr.rel (%p192) target = $region36
        $region35: #{tpu_custom_call.1} parent=27 // pred_region
          %s195 = smul.u32 4, %s14
          %p196 = scmp.lt.s32.totalorder %s195, 7
          %s197 = scalar_select %p196, %s195, 7
          %s198 = smul.addr %s197, 8
          %s199 = scalar_lea.vmem %s1, %s198
          %s200 = smul.u32 4, %s14
        $region36: #{tpu_custom_call.1} parent=27 // pred_fallthru
          _
      $region28: #{tpu_custom_call.1} parent=5 // pred_fallthru
        _
      %p201 = scmp.le.s32.totalorder 1, %s14
      %p202 = scmp.lt.s32.totalorder %s14, 3
      %p203 = pnand %p201, %p202
      %p204 = pneg %p203
      // Predicated region
      $region37: #{tpu_custom_call.1} parent=5 // pred_check
        _
      $region38: #{tpu_custom_call.1} parent=5 // pred_check_branch
        %206 = sbr.rel (%p203) target = $region40
      $region39: #{tpu_custom_call.1} parent=5 // pred_region
        %s207 = ssub.s32 %s14, 1
        %s208 = smul.u32 4, %s19
        %p209 = scmp.lt.s32.totalorder %s208, 7
        %s210 = scalar_select %p209, %s208, 7
        %s211 = smul.addr %s210, 8
        %s212 = scalar_lea.vmem %s0, %s211
        %p213 = pneg %p40
        %p214 = pneg %p37
        %s215 = smul.u32 4, %s19
        %p216 = scmp.lt.s32.totalorder %s215, 7
        %s217 = scalar_select %p216, %s215, 7
        %s218 = smul.addr %s217, 8
        %s219 = scalar_lea.vmem %s1, %s218
        %p220 = pneg %p66
        %p221 = pneg %p63
        %p222 = pneg %p87
        %p223 = pneg %p84
        %p224 = pneg %p108
        %p225 = pneg %p105
        %p226 = pneg %p129
        %p227 = pneg %p126
        %p228 = pneg %p155
        %p229 = pneg %p152
        %s230 = sand.u32 %s142, 1
        %s231 = scalar_lea.sflag [#allocation3], %s230
        %s232 = sand.u32 %s142, 1
        %s233 = smul.addr %s232, 32
        %s234 = scalar_lea.vmem [#allocation2], %s233
        %s235 = smul.u32 4, %s19
        %p236 = scmp.lt.s32.totalorder %s235, 7
        %s237 = scalar_select %p236, %s235, 7
        %s238 = smul.addr %s237, 8
        %s239 = scalar_lea.vmem %s0, %s238
        %s240 = smul.u32 4, %s19
        %s241 = smul.u32 4, %s19
        %p242 = scmp.lt.s32.totalorder %s241, 7
        %s243 = scalar_select %p242, %s241, 7
        %s244 = smul.addr %s243, 8
        %s245 = scalar_lea.vmem %s1, %s244
        %s246 = smul.u32 4, %s19
        %s247 = smul.u32 4, %s19
        %v248 = vld [vmem:[%s239] sm:$0xff]
        %v249 = vld [vmem:[%s239 + $0x8] sm:$0xff]
        %v250 = vld [vmem:[%s239 + $0x10] sm:$0xff]
        %v251 = vld [vmem:[%s239 + $0x18] sm:$0xff]
        %v252 = vld [vmem:[%s245] sm:$0xff]
        %v253 = vld [vmem:[%s245 + $0x8] sm:$0xff]
        %v254 = vld [vmem:[%s245 + $0x10] sm:$0xff]
        %v255 = vld [vmem:[%s245 + $0x18] sm:$0xff]
        %v256 = vlaneseq
        %v257 = vshrl.u32 %v256, 7
        %v258 = vadd.s32 %v257, 8
        %v259 = vadd.s32 %v257, 16
        %v260 = vadd.s32 %v257, 24
        %vm261 = vcmp.lt.s32.totalorder %v257, 0
        %v262 = vsub.s32 0, %v257
        %v263 = vsel %vm261, %v262, %v257
        %v264 = vshrl.u32 %v263, 4
        %v265 = vand.u32 %v263, 15
        %v266 = vsub.s32 0, %v265
        %v267 = vsel %vm261, %v266, %v265
        %vm268 = vcmp.lt.s32.totalorder %v258, 0
        %v269 = vsub.s32 0, %v258
        %v270 = vsel %vm268, %v269, %v258
        %v271 = vshrl.u32 %v270, 4
        %v272 = vand.u32 %v270, 15
        %v273 = vsub.s32 0, %v272
        %v274 = vsel %vm268, %v273, %v272
        %vm275 = vcmp.lt.s32.totalorder %v259, 0
        %v276 = vsub.s32 0, %v259
        %v277 = vsel %vm275, %v276, %v259
        %v278 = vshrl.u32 %v277, 4
        %v279 = vand.u32 %v277, 15
        %v280 = vsub.s32 0, %v279
        %v281 = vsel %vm275, %v280, %v279
        %vm282 = vcmp.lt.s32.totalorder %v260, 0
        %v283 = vsub.s32 0, %v260
        %v284 = vsel %vm282, %v283, %v260
        %v285 = vshrl.u32 %v284, 4
        %v286 = vand.u32 %v284, 15
        %v287 = vsub.s32 0, %v286
        %v288 = vsel %vm282, %v287, %v286
        %vm289 = vcmp.ne.s32.totalorder %v267, 0
        %vm290 = vcmp.ne.s32.totalorder %v274, 0
        %vm291 = vcmp.ne.s32.totalorder %v281, 0
        %vm292 = vcmp.ne.s32.totalorder %v288, 0
        %vm293 = vcmp.lt.s32.totalorder %v267, 0
        %vm294 = vcmp.lt.s32.totalorder %v274, 0
        %vm295 = vcmp.lt.s32.totalorder %v281, 0
        %vm296 = vcmp.lt.s32.totalorder %v288, 0
        %vm297 = vmand %vm293, %vm289
        %vm298 = vmand %vm294, %vm290
        %vm299 = vmand %vm295, %vm291
        %vm300 = vmand %vm296, %vm292
        %v301 = vadd.s32 %v267, 16
        %v302 = vadd.s32 %v274, 16
        %v303 = vadd.s32 %v281, 16
        %v304 = vadd.s32 %v288, 16
        %v305 = vsel %vm297, %v301, %v267
        %v306 = vsel %vm298, %v302, %v274
        %v307 = vsel %vm299, %v303, %v281
        %v308 = vsel %vm300, %v304, %v288
        %vm309 = vcmp.ne.s32.totalorder %v305, 0
        %vm310 = vcmp.ne.s32.totalorder %v306, 0
        %vm311 = vcmp.ne.s32.totalorder %v307, 0
        %vm312 = vcmp.ne.s32.totalorder %v308, 0
        %v313 = vsel %vm309, 1, 0
        %v314 = vsel %vm310, 1, 0
        %v315 = vsel %vm311, 1, 0
        %v316 = vsel %vm312, 1, 0
        %v317 = vcvt.s32.f32 %v313
        %v318 = vcvt.s32.f32 %v314
        %v319 = vcvt.s32.f32 %v315
        %v320 = vcvt.s32.f32 %v316
        %vm321 = vcmp.ne.s32.totalorder %v305, 15
        %vm322 = vcmp.ne.s32.totalorder %v306, 15
        %vm323 = vcmp.ne.s32.totalorder %v307, 15
        %vm324 = vcmp.ne.s32.totalorder %v308, 15
        %v325 = vsel %vm321, 1, 0
        %v326 = vsel %vm322, 1, 0
        %v327 = vsel %vm323, 1, 0
        %v328 = vsel %vm324, 1, 0
        %v329 = vcvt.s32.f32 %v325
        %v330 = vcvt.s32.f32 %v326
        %v331 = vcvt.s32.f32 %v327
        %v332 = vcvt.s32.f32 %v328
        %v333 = vld [vmem:[%s2] sm:$0xff]
        %v334 = vld [vmem:[%s2 + $0x8] sm:$0xff]
        %v335 = vld [vmem:[%s2 + $0x10] sm:$0xff]
        %v336 = vld [vmem:[%s2 + $0x18] sm:$0xff]
        %v337 = vld [vmem:[%s2 + $0x20] sm:$0xff]
        %v338 = vld [vmem:[%s2 + $0x28] sm:$0xff]
        %v339 = vld [vmem:[%s2 + $0x30] sm:$0xff]
        %v340 = vld [vmem:[%s2 + $0x38] sm:$0xff]
        %v341 = vld [vmem:[%s2 + $0x40] sm:$0xff]
        %v342 = vld [vmem:[%s2 + $0x48] sm:$0xff]
        %v343 = vld [vmem:[%s2 + $0x50] sm:$0xff]
        %v344 = vld [vmem:[%s2 + $0x58] sm:$0xff]
        %v345 = vld [vmem:[%s2 + $0x60] sm:$0xff]
        %v346 = vld [vmem:[%s2 + $0x68] sm:$0xff]
        %v347 = vld [vmem:[%s2 + $0x70] sm:$0xff]
        %v348 = vld [vmem:[%s2 + $0x78] sm:$0xff]
        %v349 = vld [vmem:[%s2 + $0x80] sm:$0xff]
        %v350 = vld [vmem:[%s2 + $0x88] sm:$0xff]
        %v351 = vld [vmem:[%s2 + $0x90] sm:$0xff]
        %v352 = vld [vmem:[%s2 + $0x98] sm:$0xff]
        %v353 = vld [vmem:[%s2 + $0xa0] sm:$0xff]
        %v354 = vld [vmem:[%s2 + $0xa8] sm:$0xff]
        %v355 = vld [vmem:[%s2 + $0xb0] sm:$0xff]
        %v356 = vld [vmem:[%s2 + $0xb8] sm:$0xff]
        %v357 = vld [vmem:[%s2 + $0xc0] sm:$0xff]
        %v358 = vld [vmem:[%s2 + $0xc8] sm:$0xff]
        %v359 = vld [vmem:[%s2 + $0xd0] sm:$0xff]
        %v360 = vld [vmem:[%s2 + $0xd8] sm:$0xff]
        %v361 = vld [vmem:[%s2 + $0xe0] sm:$0xff]
        %v362 = vld [vmem:[%s2 + $0xe8] sm:$0xff]
        %v363 = vld [vmem:[%s2 + $0xf0] sm:$0xff]
        %v364 = vld [vmem:[%s2 + $0xf8] sm:$0xff]
        %v365 = vld [vmem:[%s2 + $0x100] sm:$0xff]
        %v366 = vld [vmem:[%s2 + $0x108] sm:$0xff]
        %v367 = vld [vmem:[%s2 + $0x110] sm:$0xff]
        %v368 = vld [vmem:[%s2 + $0x118] sm:$0xff]
        %v369 = vld [vmem:[%s3] sm:$0x7]
        %v370 = vrot.slane %v248, 7
        %v371 = vrot.slane %v249, 7
        %v372 = vrot.slane %v250, 7
        %v373 = vrot.slane %v251, 7
        %vm374 = vcmp.lt.s32.totalorder %v257, 1
        %v375 = vsel %vm374, %v372, %v373
        %v376 = vsel %vm374, %v371, %v372
        %v377 = vsel %vm374, %v370, %v371
        %v378 = vsel %vm374, %v373, %v370
        %v379 = vmul.f32 %v378, %v317
        %v380 = vmul.f32 %v377, %v318
        %v381 = vmul.f32 %v376, %v319
        %v382 = vmul.f32 %v375, %v320
        %v383 = vrot.slane %v248, 1
        %v384 = vrot.slane %v249, 1
        %v385 = vrot.slane %v250, 1
        %v386 = vrot.slane %v251, 1
        %vm387 = vcmp.lt.s32.totalorder %v257, 7
        %v388 = vsel %vm387, %v385, %v386
        %v389 = vsel %vm387, %v384, %v385
        %v390 = vsel %vm387, %v383, %v384
        %v391 = vsel %vm387, %v386, %v383
        %v392 = vmul.f32 %v390, %v329
        %v393 = vmul.f32 %v389, %v330
        %v394 = vmul.f32 %v388, %v331
        %v395 = vmul.f32 %v391, %v332
        %400 = vrot.lane.b32.xlu0 %v248, 32
        %v401 = vpop.permute.xlu0 %400
        %402 = vrot.lane.b32.xlu0 %v249, 32
        %v403 = vpop.permute.xlu0 %402
        %404 = vrot.lane.b32.xlu0 %v250, 32
        %v405 = vpop.permute.xlu0 %404
        %406 = vrot.lane.b32.xlu0 %v251, 32
        %v407 = vpop.permute.xlu0 %406
        %416 = vrot.lane.b32.xlu0 %v392, 64
        %v417 = vpop.permute.xlu0 %416
        %418 = vrot.lane.b32.xlu0 %v393, 64
        %v419 = vpop.permute.xlu0 %418
        %420 = vrot.lane.b32.xlu0 %v394, 64
        %v421 = vpop.permute.xlu0 %420
        %422 = vrot.lane.b32.xlu0 %v395, 64
        %v423 = vpop.permute.xlu0 %422
        %vm428 = vcmask 261120
        %v429 = vsel %vm428, %v379, %v401
        %v430 = vsel %vm428, %v380, %v403
        %v431 = vsel %vm428, %v381, %v405
        %v432 = vsel %vm428, %v382, %v407
        %vm433 = vcmask 523264
        %v434 = vsel %vm433, %v429, %v417
        %v435 = vsel %vm433, %v430, %v419
        %v436 = vsel %vm433, %v431, %v421
        %v437 = vsel %vm433, %v432, %v423
        %v438 = vlaneseq
        %v439 = vshrl.u32 %v438, 7
        %v440 = vsub.s32 0, %v439
        %v441 = vrot.slane %v369, %v440
        %vm442 = vcmask 785408
        %v444 = vsel %vm442, %v434, 0
        %v447 = vsel %vm442, %v435, 0
        %v450 = vsel %vm442, %v436, 0
        %v453 = vsel %vm442, %v437, 0
        %455 = vmatprep.subr.mxu0 0.0
        %456 = vmatpush1.msra.mxu0 %v333
        %457 = vmatprep.subr.mxu0 0.0
        %458 = vmatpush1.msra.mxu0 %v334
        %459 = vmatprep.subr.mxu0 0.0
        %460 = vmatpush1.msra.mxu0 %v335
        %461 = vmatprep.subr.mxu0 0.0
        %462 = vmatpush1.msra.mxu0 %v336
        %463 = vmatprep.subr.mxu0 0.0
        %464 = vmatpush1.msra.mxu0 %v337
        %465 = vmatprep.subr.mxu0 0.0
        %466 = vmatpush1.msra.mxu0 %v338
        %467 = vmatprep.subr.mxu0 0.0
        %468 = vmatpush1.msra.mxu0 %v339
        %469 = vmatprep.subr.mxu0 0.0
        %470 = vmatpush1.msra.mxu0 %v340
        %471 = vmatprep.subr.mxu0 0.0
        %472 = vmatpush1.msra.mxu0 %v341
        %473 = vmatprep.subr.mxu0 0.0
        %474 = vmatpush1.msra.mxu0 %v342
        %475 = vmatprep.subr.mxu0 0.0
        %476 = vmatpush1.msra.mxu0 %v343
        %477 = vmatprep.subr.mxu0 0.0
        %478 = vmatpush1.msra.mxu0 %v344
        %479 = vmatprep.subr.mxu0 0.0
        %480 = vmatpush1.msra.mxu0 0.0
        %481 = vmatprep.subr.mxu0 0.0
        %482 = vmatpush1.msra.mxu0 0.0
        %483 = vmatprep.subr.mxu0 0.0
        %484 = vmatpush1.msra.mxu0 0.0
        %485 = vmatprep.subr.mxu0 0.0
        %486 = vmatpush1.msra.mxu0 0.0
        %487 = vmatprep.subr.mxu0 0.0
        %488 = vmatpush1.msra.mxu0 0.0
        %489 = vmatprep.subr.mxu0 0.0
        %490 = vmatpush1.msra.mxu0 0.0
        %491 = vmatprep.subr.mxu0 0.0
        %492 = vmatpush1.msra.mxu0 0.0
        %493 = vmatprep.subr.mxu0 0.0
        %494 = vmatpush1.msra.mxu0 0.0
        %495 = vmatprep.subr.mxu0 0.0
        %496 = vmatpush1.msra.mxu0 0.0
        %497 = vmatprep.subr.mxu0 0.0
        %498 = vmatpush1.msra.mxu0 0.0
        %499 = vmatprep.subr.mxu0 0.0
        %500 = vmatpush1.msra.mxu0 0.0
        %501 = vmatprep.subr.mxu0 0.0
        %502 = vmatpush1.msra.mxu0 0.0
        %503 = vmatprep.subr.mxu0 0.0
        %504 = vmatpush1.msra.mxu0 0.0
        %505 = vmatprep.subr.mxu0 0.0
        %506 = vmatpush1.msra.mxu0 0.0
        %507 = vmatprep.subr.mxu0 0.0
        %508 = vmatpush1.msra.mxu0 0.0
        %509 = vmatprep.subr.mxu0 0.0
        %510 = vmatpush1.msra.mxu0 0.0
        %511 = vmatprep.subr.mxu0 0.0
        %512 = vmatpush1.msra.mxu0 0.0
        %513 = vmatprep.subr.mxu0 0.0
        %514 = vmatpush1.msra.mxu0 0.0
        %515 = vmatprep.subr.mxu0 0.0
        %516 = vmatpush1.msra.mxu0 0.0
        %517 = vmatprep.subr.mxu0 0.0
        %518 = vmatpush1.msra.mxu0 0.0
        %519 = vmatprep.mubr.f32.mxu0 0.0
        %520 = vmatmul.mubr.f32.gmra.mrb[0].mxu0 %v444
        %v521 = vpop.f32.mrb[0].mxu0
        %v522 = vadd.f32 %v441, %v521
        %v523 = vpop.f32.mrb[0].mxu0
        %524 = vmatprep.mubr.f32.mxu0 0.0
        %525 = vmatmul.mubr.f32.gmra.mrb[0].mxu0 %v447
        %v526 = vpop.f32.mrb[0].mxu0
        %v527 = vadd.f32 %v441, %v526
        %v528 = vpop.f32.mrb[0].mxu0
        %529 = vmatprep.mubr.f32.mxu0 0.0
        %530 = vmatmul.mubr.f32.gmra.mrb[0].mxu0 %v450
        %v531 = vpop.f32.mrb[0].mxu0
        %v532 = vadd.f32 %v441, %v531
        %v533 = vpop.f32.mrb[0].mxu0
        %534 = vmatprep.mubr.f32.mxu0 0.0
        %535 = vmatmul.mubr.f32.gmra.mrb[0].mxu0 %v453
        %v536 = vpop.f32.mrb[0].mxu0
        %v537 = vadd.f32 %v441, %v536
        %v538 = vpop.f32.mrb[0].mxu0
        %539 = vdwg.mxu0
        %541 = vset.pattern.permute.xlu0 0
        %542 = vperm.xlu0 %541, %v252
        %v543 = vpop.permute.xlu0 %542
        %546 = vset.pattern.permute.xlu0 0
        %547 = vperm.xlu0 %546, %v253
        %v548 = vpop.permute.xlu0 %547
        %551 = vset.pattern.permute.xlu0 0
        %552 = vperm.xlu0 %551, %v254
        %v553 = vpop.permute.xlu0 %552
        %556 = vset.pattern.permute.xlu0 0
        %557 = vperm.xlu0 %556, %v255
        %v558 = vpop.permute.xlu0 %557
        %v560 = vmul.f32 %v522, %v543
        %v561 = vmul.f32 %v527, %v548
        %v562 = vmul.f32 %v532, %v553
        %v563 = vmul.f32 %v537, %v558
        %v564 = vmax.f32 %v560, 0.0
        %v565 = vmax.f32 %v561, 0.0
        %v566 = vmax.f32 %v562, 0.0
        %v567 = vmax.f32 %v563, 0.0
        %v568 = vrot.slane %v564, 7
        %v569 = vrot.slane %v565, 7
        %v570 = vrot.slane %v566, 7
        %v571 = vrot.slane %v567, 7
        %v572 = vsel %vm374, %v570, %v571
        %v573 = vsel %vm374, %v569, %v570
        %v574 = vsel %vm374, %v568, %v569
        %v575 = vsel %vm374, %v571, %v568
        %v576 = vmul.f32 %v575, %v317
        %v577 = vmul.f32 %v574, %v318
        %v578 = vmul.f32 %v573, %v319
        %v579 = vmul.f32 %v572, %v320
        %v580 = vrot.slane %v564, 1
        %v581 = vrot.slane %v565, 1
        %v582 = vrot.slane %v566, 1
        %v583 = vrot.slane %v567, 1
        %v584 = vsel %vm387, %v582, %v583
        %v585 = vsel %vm387, %v581, %v582
        %v586 = vsel %vm387, %v580, %v581
        %v587 = vsel %vm387, %v583, %v580
        %v588 = vmul.f32 %v586, %v329
        %v589 = vmul.f32 %v585, %v330
        %v590 = vmul.f32 %v584, %v331
        %v591 = vmul.f32 %v587, %v332
        %596 = vrot.lane.b32.xlu0 %v564, 32
        %v597 = vpop.permute.xlu0 %596
        %598 = vrot.lane.b32.xlu0 %v565, 32
        %v599 = vpop.permute.xlu0 %598
        %600 = vrot.lane.b32.xlu0 %v566, 32
        %v601 = vpop.permute.xlu0 %600
        %602 = vrot.lane.b32.xlu0 %v567, 32
        %v603 = vpop.permute.xlu0 %602
        %612 = vrot.lane.b32.xlu0 %v588, 64
        %v613 = vpop.permute.xlu0 %612
        %614 = vrot.lane.b32.xlu0 %v589, 64
        %v615 = vpop.permute.xlu0 %614
        %616 = vrot.lane.b32.xlu0 %v590, 64
        %v617 = vpop.permute.xlu0 %616
        %618 = vrot.lane.b32.xlu0 %v591, 64
        %v619 = vpop.permute.xlu0 %618
        %v624 = vsel %vm428, %v576, %v597
        %v625 = vsel %vm428, %v577, %v599
        %v626 = vsel %vm428, %v578, %v601
        %v627 = vsel %vm428, %v579, %v603
        %v628 = vsel %vm433, %v624, %v613
        %v629 = vsel %vm433, %v625, %v615
        %v630 = vsel %vm433, %v626, %v617
        %v631 = vsel %vm433, %v627, %v619
        %v632 = vlaneseq
        %v633 = vshrl.u32 %v632, 7
        %v634 = vsub.s32 1, %v633
        %v635 = vrot.slane %v369, %v634
        %v637 = vsel %vm442, %v628, 0
        %v640 = vsel %vm442, %v629, 0
        %v643 = vsel %vm442, %v630, 0
        %v646 = vsel %vm442, %v631, 0
        %648 = vmatprep.subr.mxu0 0.0
        %649 = vmatpush1.msra.mxu0 %v345
        %650 = vmatprep.subr.mxu0 0.0
        %651 = vmatpush1.msra.mxu0 %v346
        %652 = vmatprep.subr.mxu0 0.0
        %653 = vmatpush1.msra.mxu0 %v347
        %654 = vmatprep.subr.mxu0 0.0
        %655 = vmatpush1.msra.mxu0 %v348
        %656 = vmatprep.subr.mxu0 0.0
        %657 = vmatpush1.msra.mxu0 %v349
        %658 = vmatprep.subr.mxu0 0.0
        %659 = vmatpush1.msra.mxu0 %v350
        %660 = vmatprep.subr.mxu0 0.0
        %661 = vmatpush1.msra.mxu0 %v351
        %662 = vmatprep.subr.mxu0 0.0
        %663 = vmatpush1.msra.mxu0 %v352
        %664 = vmatprep.subr.mxu0 0.0
        %665 = vmatpush1.msra.mxu0 %v353
        %666 = vmatprep.subr.mxu0 0.0
        %667 = vmatpush1.msra.mxu0 %v354
        %668 = vmatprep.subr.mxu0 0.0
        %669 = vmatpush1.msra.mxu0 %v355
        %670 = vmatprep.subr.mxu0 0.0
        %671 = vmatpush1.msra.mxu0 %v356
        %672 = vmatprep.subr.mxu0 0.0
        %673 = vmatpush1.msra.mxu0 0.0
        %674 = vmatprep.subr.mxu0 0.0
        %675 = vmatpush1.msra.mxu0 0.0
        %676 = vmatprep.subr.mxu0 0.0
        %677 = vmatpush1.msra.mxu0 0.0
        %678 = vmatprep.subr.mxu0 0.0
        %679 = vmatpush1.msra.mxu0 0.0
        %680 = vmatprep.subr.mxu0 0.0
        %681 = vmatpush1.msra.mxu0 0.0
        %682 = vmatprep.subr.mxu0 0.0
        %683 = vmatpush1.msra.mxu0 0.0
        %684 = vmatprep.subr.mxu0 0.0
        %685 = vmatpush1.msra.mxu0 0.0
        %686 = vmatprep.subr.mxu0 0.0
        %687 = vmatpush1.msra.mxu0 0.0
        %688 = vmatprep.subr.mxu0 0.0
        %689 = vmatpush1.msra.mxu0 0.0
        %690 = vmatprep.subr.mxu0 0.0
        %691 = vmatpush1.msra.mxu0 0.0
        %692 = vmatprep.subr.mxu0 0.0
        %693 = vmatpush1.msra.mxu0 0.0
        %694 = vmatprep.subr.mxu0 0.0
        %695 = vmatpush1.msra.mxu0 0.0
        %696 = vmatprep.subr.mxu0 0.0
        %697 = vmatpush1.msra.mxu0 0.0
        %698 = vmatprep.subr.mxu0 0.0
        %699 = vmatpush1.msra.mxu0 0.0
        %700 = vmatprep.subr.mxu0 0.0
        %701 = vmatpush1.msra.mxu0 0.0
        %702 = vmatprep.subr.mxu0 0.0
        %703 = vmatpush1.msra.mxu0 0.0
        %704 = vmatprep.subr.mxu0 0.0
        %705 = vmatpush1.msra.mxu0 0.0
        %706 = vmatprep.subr.mxu0 0.0
        %707 = vmatpush1.msra.mxu0 0.0
        %708 = vmatprep.subr.mxu0 0.0
        %709 = vmatpush1.msra.mxu0 0.0
        %710 = vmatprep.subr.mxu0 0.0
        %711 = vmatpush1.msra.mxu0 0.0
        %712 = vmatprep.mubr.f32.mxu0 0.0
        %713 = vmatmul.mubr.f32.gmra.mrb[0].mxu0 %v637
        %v714 = vpop.f32.mrb[0].mxu0
        %v715 = vadd.f32 %v635, %v714
        %v716 = vpop.f32.mrb[0].mxu0
        %717 = vmatprep.mubr.f32.mxu0 0.0
        %718 = vmatmul.mubr.f32.gmra.mrb[0].mxu0 %v640
        %v719 = vpop.f32.mrb[0].mxu0
        %v720 = vadd.f32 %v635, %v719
        %v721 = vpop.f32.mrb[0].mxu0
        %722 = vmatprep.mubr.f32.mxu0 0.0
        %723 = vmatmul.mubr.f32.gmra.mrb[0].mxu0 %v643
        %v724 = vpop.f32.mrb[0].mxu0
        %v725 = vadd.f32 %v635, %v724
        %v726 = vpop.f32.mrb[0].mxu0
        %727 = vmatprep.mubr.f32.mxu0 0.0
        %728 = vmatmul.mubr.f32.gmra.mrb[0].mxu0 %v646
        %v729 = vpop.f32.mrb[0].mxu0
        %v730 = vadd.f32 %v635, %v729
        %v731 = vpop.f32.mrb[0].mxu0
        %732 = vdwg.mxu0
        %v733 = vmul.f32 %v715, %v543
        %v734 = vmul.f32 %v720, %v548
        %v735 = vmul.f32 %v725, %v553
        %v736 = vmul.f32 %v730, %v558
        %v737 = vmax.f32 %v733, 0.0
        %v738 = vmax.f32 %v734, 0.0
        %v739 = vmax.f32 %v735, 0.0
        %v740 = vmax.f32 %v736, 0.0
        %v741 = vrot.slane %v737, 7
        %v742 = vrot.slane %v738, 7
        %v743 = vrot.slane %v739, 7
        %v744 = vrot.slane %v740, 7
        %v745 = vsel %vm374, %v743, %v744
        %v746 = vsel %vm374, %v742, %v743
        %v747 = vsel %vm374, %v741, %v742
        %v748 = vsel %vm374, %v744, %v741
        %v749 = vmul.f32 %v748, %v317
        %v750 = vmul.f32 %v747, %v318
        %v751 = vmul.f32 %v746, %v319
        %v752 = vmul.f32 %v745, %v320
        %v753 = vrot.slane %v737, 1
        %v754 = vrot.slane %v738, 1
        %v755 = vrot.slane %v739, 1
        %v756 = vrot.slane %v740, 1
        %v757 = vsel %vm387, %v755, %v756
        %v758 = vsel %vm387, %v754, %v755
        %v759 = vsel %vm387, %v753, %v754
        %v760 = vsel %vm387, %v756, %v753
        %v761 = vmul.f32 %v759, %v329
        %v762 = vmul.f32 %v758, %v330
        %v763 = vmul.f32 %v757, %v331
        %v764 = vmul.f32 %v760, %v332
        %769 = vrot.lane.b32.xlu0 %v737, 32
        %v770 = vpop.permute.xlu0 %769
        %771 = vrot.lane.b32.xlu0 %v738, 32
        %v772 = vpop.permute.xlu0 %771
        %773 = vrot.lane.b32.xlu0 %v739, 32
        %v774 = vpop.permute.xlu0 %773
        %775 = vrot.lane.b32.xlu0 %v740, 32
        %v776 = vpop.permute.xlu0 %775
        %785 = vrot.lane.b32.xlu0 %v761, 64
        %v786 = vpop.permute.xlu0 %785
        %787 = vrot.lane.b32.xlu0 %v762, 64
        %v788 = vpop.permute.xlu0 %787
        %789 = vrot.lane.b32.xlu0 %v763, 64
        %v790 = vpop.permute.xlu0 %789
        %791 = vrot.lane.b32.xlu0 %v764, 64
        %v792 = vpop.permute.xlu0 %791
        %v797 = vsel %vm428, %v749, %v770
        %v798 = vsel %vm428, %v750, %v772
        %v799 = vsel %vm428, %v751, %v774
        %v800 = vsel %vm428, %v752, %v776
        %v801 = vsel %vm433, %v797, %v786
        %v802 = vsel %vm433, %v798, %v788
        %v803 = vsel %vm433, %v799, %v790
        %v804 = vsel %vm433, %v800, %v792
        %v805 = vlaneseq
        %v806 = vshrl.u32 %v805, 7
        %v807 = vsub.s32 2, %v806
        %v808 = vrot.slane %v369, %v807
        %v810 = vsel %vm442, %v801, 0
        %v813 = vsel %vm442, %v802, 0
        %v816 = vsel %vm442, %v803, 0
        %v819 = vsel %vm442, %v804, 0
        %821 = vmatprep.subr.mxu0 0.0
        %822 = vmatpush1.msra.mxu0 %v357
        %823 = vmatprep.subr.mxu0 0.0
        %824 = vmatpush1.msra.mxu0 %v358
        %825 = vmatprep.subr.mxu0 0.0
        %826 = vmatpush1.msra.mxu0 %v359
        %827 = vmatprep.subr.mxu0 0.0
        %828 = vmatpush1.msra.mxu0 %v360
        %829 = vmatprep.subr.mxu0 0.0
        %830 = vmatpush1.msra.mxu0 %v361
        %831 = vmatprep.subr.mxu0 0.0
        %832 = vmatpush1.msra.mxu0 %v362
        %833 = vmatprep.subr.mxu0 0.0
        %834 = vmatpush1.msra.mxu0 %v363
        %835 = vmatprep.subr.mxu0 0.0
        %836 = vmatpush1.msra.mxu0 %v364
        %837 = vmatprep.subr.mxu0 0.0
        %838 = vmatpush1.msra.mxu0 %v365
        %839 = vmatprep.subr.mxu0 0.0
        %840 = vmatpush1.msra.mxu0 %v366
        %841 = vmatprep.subr.mxu0 0.0
        %842 = vmatpush1.msra.mxu0 %v367
        %843 = vmatprep.subr.mxu0 0.0
        %844 = vmatpush1.msra.mxu0 %v368
        %845 = vmatprep.subr.mxu0 0.0
        %846 = vmatpush1.msra.mxu0 0.0
        %847 = vmatprep.subr.mxu0 0.0
        %848 = vmatpush1.msra.mxu0 0.0
        %849 = vmatprep.subr.mxu0 0.0
        %850 = vmatpush1.msra.mxu0 0.0
        %851 = vmatprep.subr.mxu0 0.0
        %852 = vmatpush1.msra.mxu0 0.0
        %853 = vmatprep.subr.mxu0 0.0
        %854 = vmatpush1.msra.mxu0 0.0
        %855 = vmatprep.subr.mxu0 0.0
        %856 = vmatpush1.msra.mxu0 0.0
        %857 = vmatprep.subr.mxu0 0.0
        %858 = vmatpush1.msra.mxu0 0.0
        %859 = vmatprep.subr.mxu0 0.0
        %860 = vmatpush1.msra.mxu0 0.0
        %861 = vmatprep.subr.mxu0 0.0
        %862 = vmatpush1.msra.mxu0 0.0
        %863 = vmatprep.subr.mxu0 0.0
        %864 = vmatpush1.msra.mxu0 0.0
        %865 = vmatprep.subr.mxu0 0.0
        %866 = vmatpush1.msra.mxu0 0.0
        %867 = vmatprep.subr.mxu0 0.0
        %868 = vmatpush1.msra.mxu0 0.0
        %869 = vmatprep.subr.mxu0 0.0
        %870 = vmatpush1.msra.mxu0 0.0
        %871 = vmatprep.subr.mxu0 0.0
        %872 = vmatpush1.msra.mxu0 0.0
        %873 = vmatprep.subr.mxu0 0.0
        %874 = vmatpush1.msra.mxu0 0.0
        %875 = vmatprep.subr.mxu0 0.0
        %876 = vmatpush1.msra.mxu0 0.0
        %877 = vmatprep.subr.mxu0 0.0
        %878 = vmatpush1.msra.mxu0 0.0
        %879 = vmatprep.subr.mxu0 0.0
        %880 = vmatpush1.msra.mxu0 0.0
        %881 = vmatprep.subr.mxu0 0.0
        %882 = vmatpush1.msra.mxu0 0.0
        %883 = vmatprep.subr.mxu0 0.0
        %884 = vmatpush1.msra.mxu0 0.0
        %885 = vmatprep.mubr.f32.mxu0 0.0
        %886 = vmatmul.mubr.f32.gmra.mrb[0].mxu0 %v810
        %v887 = vpop.f32.mrb[0].mxu0
        %v888 = vadd.f32 %v808, %v887
        %v889 = vpop.f32.mrb[0].mxu0
        %890 = vmatprep.mubr.f32.mxu0 0.0
        %891 = vmatmul.mubr.f32.gmra.mrb[0].mxu0 %v813
        %v892 = vpop.f32.mrb[0].mxu0
        %v893 = vadd.f32 %v808, %v892
        %v894 = vpop.f32.mrb[0].mxu0
        %895 = vmatprep.mubr.f32.mxu0 0.0
        %896 = vmatmul.mubr.f32.gmra.mrb[0].mxu0 %v816
        %v897 = vpop.f32.mrb[0].mxu0
        %v898 = vadd.f32 %v808, %v897
        %v899 = vpop.f32.mrb[0].mxu0
        %900 = vmatprep.mubr.f32.mxu0 0.0
        %901 = vmatmul.mubr.f32.gmra.mrb[0].mxu0 %v819
        %v902 = vpop.f32.mrb[0].mxu0
        %v903 = vadd.f32 %v808, %v902
        %v904 = vpop.f32.mrb[0].mxu0
        %905 = vdwg.mxu0
        %v906 = vmul.f32 %v888, %v543
        %v907 = vmul.f32 %v893, %v548
        %v908 = vmul.f32 %v898, %v553
        %v909 = vmul.f32 %v903, %v558
        %v910 = vmul.f32 %v906, %v906
        %v911 = vmul.f32 %v907, %v907
        %v912 = vmul.f32 %v908, %v908
        %v913 = vmul.f32 %v909, %v909
        %v914 = vsel %vm428, %v910, 0.0
        %915 = vadd.xlane.f32.xlu0 %v914
        %v916 = vpop.xlane.xlu0 %915
        %v917 = vsel %vm428, %v911, 0.0
        %918 = vadd.xlane.f32.xlu0 %v917
        %v919 = vpop.xlane.xlu0 %918
        %v920 = vsel %vm428, %v912, 0.0
        %921 = vadd.xlane.f32.xlu0 %v920
        %v922 = vpop.xlane.xlu0 %921
        %v923 = vsel %vm428, %v913, 0.0
        %924 = vadd.xlane.f32.xlu0 %v923
        %v925 = vpop.xlane.xlu0 %924
        %v926 = vmax.f32 %v916, 1e-24
        %v927 = vmax.f32 %v919, 1e-24
        %v928 = vmax.f32 %v922, 1e-24
        %v929 = vmax.f32 %v925, 1e-24
        %v930 = vrsqrt.pop %v926
        %v931 = vrsqrt.pop %v927
        %v932 = vrsqrt.pop %v928
        %v933 = vrsqrt.pop %v929
        %v934 = vmul.f32 %v906, %v930
        %v935 = vmul.f32 %v907, %v931
        %v936 = vmul.f32 %v908, %v932
        %v937 = vmul.f32 %v909, %v933
        %v938 = vld [vmem:[%s4] sm:$0xff]
        %v939 = vld [vmem:[%s4 + $0x8] sm:$0xff]
        %v940 = vld [vmem:[%s4 + $0x10] sm:$0xff]
        %v941 = vld [vmem:[%s4 + $0x18] sm:$0xff]
        %v943 = vsel %vm428, %v934, 0
        %v946 = vsel %vm428, %v935, 0
        %v949 = vsel %vm428, %v936, 0
        %v952 = vsel %vm428, %v937, 0
        %954 = vmatprep.subr.mxu0 0.0
        %955 = vmatpush1.msra.mxu0 %v938
        %956 = vmatprep.subr.mxu0 0.0
        %957 = vmatpush1.msra.mxu0 %v939
        %958 = vmatprep.subr.mxu0 0.0
        %959 = vmatpush1.msra.mxu0 %v940
        %960 = vmatprep.subr.mxu0 0.0
        %961 = vmatpush1.msra.mxu0 %v941
        %962 = vmatprep.subr.mxu0 0.0
        %963 = vmatpush1.msra.mxu0 0.0
        %964 = vmatprep.subr.mxu0 0.0
        %965 = vmatpush1.msra.mxu0 0.0
        %966 = vmatprep.subr.mxu0 0.0
        %967 = vmatpush1.msra.mxu0 0.0
        %968 = vmatprep.subr.mxu0 0.0
        %969 = vmatpush1.msra.mxu0 0.0
        %970 = vmatprep.subr.mxu0 0.0
        %971 = vmatpush1.msra.mxu0 0.0
        %972 = vmatprep.subr.mxu0 0.0
        %973 = vmatpush1.msra.mxu0 0.0
        %974 = vmatprep.subr.mxu0 0.0
        %975 = vmatpush1.msra.mxu0 0.0
        %976 = vmatprep.subr.mxu0 0.0
        %977 = vmatpush1.msra.mxu0 0.0
        %978 = vmatprep.subr.mxu0 0.0
        %979 = vmatpush1.msra.mxu0 0.0
        %980 = vmatprep.subr.mxu0 0.0
        %981 = vmatpush1.msra.mxu0 0.0
        %982 = vmatprep.subr.mxu0 0.0
        %983 = vmatpush1.msra.mxu0 0.0
        %984 = vmatprep.subr.mxu0 0.0
        %985 = vmatpush1.msra.mxu0 0.0
        %986 = vmatprep.subr.mxu0 0.0
        %987 = vmatpush1.msra.mxu0 0.0
        %988 = vmatprep.subr.mxu0 0.0
        %989 = vmatpush1.msra.mxu0 0.0
        %990 = vmatprep.subr.mxu0 0.0
        %991 = vmatpush1.msra.mxu0 0.0
        %992 = vmatprep.subr.mxu0 0.0
        %993 = vmatpush1.msra.mxu0 0.0
        %994 = vmatprep.subr.mxu0 0.0
        %995 = vmatpush1.msra.mxu0 0.0
        %996 = vmatprep.subr.mxu0 0.0
        %997 = vmatpush1.msra.mxu0 0.0
        %998 = vmatprep.subr.mxu0 0.0
        %999 = vmatpush1.msra.mxu0 0.0
        %1000 = vmatprep.subr.mxu0 0.0
        %1001 = vmatpush1.msra.mxu0 0.0
        %1002 = vmatprep.subr.mxu0 0.0
        %1003 = vmatpush1.msra.mxu0 0.0
        %1004 = vmatprep.subr.mxu0 0.0
        %1005 = vmatpush1.msra.mxu0 0.0
        %1006 = vmatprep.subr.mxu0 0.0
        %1007 = vmatpush1.msra.mxu0 0.0
        %1008 = vmatprep.subr.mxu0 0.0
        %1009 = vmatpush1.msra.mxu0 0.0
        %1010 = vmatprep.subr.mxu0 0.0
        %1011 = vmatpush1.msra.mxu0 0.0
        %1012 = vmatprep.subr.mxu0 0.0
        %1013 = vmatpush1.msra.mxu0 0.0
        %1014 = vmatprep.subr.mxu0 0.0
        %1015 = vmatpush1.msra.mxu0 0.0
        %1016 = vmatprep.subr.mxu0 0.0
        %1017 = vmatpush1.msra.mxu0 0.0
        %1018 = vmatprep.mubr.f32.mxu0 0.0
        %1019 = vmatmul.mubr.f32.gmra.mrb[0].mxu0 %v943
        %v1020 = vpop.f32.mrb[0].mxu0
        %v1021 = vadd.f32 0.0, %v1020
        %v1022 = vpop.f32.mrb[0].mxu0
        %1023 = vmatprep.mubr.f32.mxu0 0.0
        %1024 = vmatmul.mubr.f32.gmra.mrb[0].mxu0 %v946
        %v1025 = vpop.f32.mrb[0].mxu0
        %v1026 = vadd.f32 0.0, %v1025
        %v1027 = vpop.f32.mrb[0].mxu0
        %1028 = vmatprep.mubr.f32.mxu0 0.0
        %1029 = vmatmul.mubr.f32.gmra.mrb[0].mxu0 %v949
        %v1030 = vpop.f32.mrb[0].mxu0
        %v1031 = vadd.f32 0.0, %v1030
        %v1032 = vpop.f32.mrb[0].mxu0
        %1033 = vmatprep.mubr.f32.mxu0 0.0
        %1034 = vmatmul.mubr.f32.gmra.mrb[0].mxu0 %v952
        %v1035 = vpop.f32.mrb[0].mxu0
        %v1036 = vadd.f32 0.0, %v1035
        %v1037 = vpop.f32.mrb[0].mxu0
        %1038 = vdwg.mxu0
        %1039 = vst [vmem:[%s234] sm:$0xff] %v1021
        %1040 = vst [vmem:[%s234 + $0x8] sm:$0xff] %v1026
        %1041 = vst [vmem:[%s234 + $0x10] sm:$0xff] %v1031
        %1042 = vst [vmem:[%s234 + $0x18] sm:$0xff] %v1036
        %s1043 = sand.u32 %s142, 1
        %s1044 = scalar_lea.sflag [#allocation3], %s1043
        %s1045 = sand.u32 %s142, 1
        %s1046 = smul.addr %s1045, 32
        %s1047 = scalar_lea.vmem [#allocation2], %s1046
        // Predicated region
        $region41: #{tpu_custom_call.1} parent=39 // pred_check
          %p1048 = pneg %p152
        $region42: #{tpu_custom_call.1} parent=39 // pred_check_branch
          %1050 = sbr.rel (%p1048) target = $region44
        $region43: #{tpu_custom_call.1} parent=39 // pred_region
          %s1051 = smul.u32 4, %s19
          %s1053 = ssub.s32 512, 512
          %1054 = vsyncadd %s1044, %s1053
          %s1055 = smul.addr %s1051, 128
          %s1056 = scalar_lea.hbm %s5, %s1055
          %s1057 = sshll.u32 %s1047, 4
          %s1058 = int_to_ptr.vmem [resolvable:$true] %s1057
          %1063 = dma.vmem_to_hbm [thread:$0]  %s1058, 512, %s1056, %s1044, 128, 128, 8
        $region44: #{tpu_custom_call.1} parent=39 // pred_fallthru
          _
      $region40: #{tpu_custom_call.1} parent=5 // pred_fallthru
        _
      %p1064 = scmp.le.s32.totalorder 2, %s14
      // Predicated region
      $region45: #{tpu_custom_call.1} parent=5 // pred_check
        %p1065 = pneg %p1064
      $region46: #{tpu_custom_call.1} parent=5 // pred_check_branch
        %1067 = sbr.rel (%p1065) target = $region48
      $region47: #{tpu_custom_call.1} parent=5 // pred_region
        %s1068 = ssub.s32 %s14, 2
        // Predicated region
        $region49: #{tpu_custom_call.1} parent=47 // pred_check
          %p1069 = pneg %p158
        $region50: #{tpu_custom_call.1} parent=47 // pred_check_branch
          %1071 = sbr.rel (%p1069) target = $region52
        $region51: #{tpu_custom_call.1} parent=47 // pred_region
          %s1072 = sand.u32 %s143, 1
          %s1073 = scalar_lea.sflag [#allocation3], %s1072
          %s1074 = sand.u32 %s143, 1
          %s1075 = smul.addr %s1074, 32
          %s1076 = scalar_lea.vmem [#allocation2], %s1075
          %1077 = dma.done %s1073, 512
        $region52: #{tpu_custom_call.1} parent=47 // pred_fallthru
          _
      $region48: #{tpu_custom_call.1} parent=5 // pred_fallthru
        _
    $region6: #{tpu_custom_call.1} parent=1 // loop_footer
      %s18 = sadd.s32 1, %s14
    $region7: #{tpu_custom_call.1} parent=1 // loop_footer_branch
      %13 = sbr.rel target = $region3
    $region8: #{tpu_custom_call.1} parent=1 // loop_exit
      _
    %1078 = vsyncpa [#allocation3], 1
    %s1079 = scalar_lea.sflag [#allocation3], 1
    %1080 = vsyncpa %s1079, 1

</llo_original>
